<compile_context>
chip_gen: v6e
topology: v6e:2x2x1
jax: 0.10.0
libtpu: 0.0.40
codegen_flags: <defaults>
</compile_context>

<pallas_src>
import jax
import jax.numpy as jnp
from jax.experimental import pallas as pl
from jax.experimental.pallas import tpu as pltpu

EMB_DIM = 64
BN_EPS = 1e-5


def _round_up(x, m):
    return ((x + m - 1) // m) * m


def metadata_kernel(idx_ref, logits_tbl_ref, o_ref):
    # idx_ref        : (TB, 1)         int32 site ids (rows >= true B are zero padding)
    # logits_tbl_ref : (S_pad, C_pad)  precomputed per-site logits (Emb->BN->Linear fused)
    # o_ref          : (TB, C_pad)
    TB = idx_ref.shape[0]
    S = logits_tbl_ref.shape[0]

    # Gather-as-matmul: onehot(idx) @ L on the MXU (bias already folded into L).
    # Cost is O(TB*S) VPU compares + one MXU contraction over K=S — fine for S ~ tens.
    # TODO(synk): for large vocabularies (S beyond a few hundred) switch to a
    #             scalar-prefetch row gather (PrefetchScalarGridSpec with idx in SMEM)
    #             instead of materializing the one-hot.
    site_iota = jax.lax.broadcasted_iota(jnp.int32, (TB, S), dimension=1)
    onehot = (idx_ref[...] == site_iota).astype(jnp.float32)          # (TB, S_pad)
    o_ref[...] = jnp.dot(onehot, logits_tbl_ref[...],
                         preferred_element_type=jnp.float32).astype(o_ref.dtype)


def metadata_prepare(table, gamma, beta, run_mean, run_var, W, b):
    """One-time (init-time) fold of Embedding -> BatchNorm(eval) -> Linear into a
    padded per-site logits table.  Call once and cache; NOT part of the hot path."""
    S, D = table.shape
    C = W.shape[1]

    inv_std = jax.lax.rsqrt(run_var.astype(jnp.float32) + BN_EPS)     # (D,)
    scale = gamma * inv_std                                           # (D,)
    shift = beta - run_mean * scale                                   # (D,)
    Wf = scale[:, None] * W                                           # (D, C)
    bf = b + shift @ W                                                # (C,)
    L = table.astype(jnp.float32) @ Wf + bf                           # (S, C) per-site logits

    S_pad = _round_up(S, 8)                                           # sublane aligned
    C_pad = max(128, _round_up(C, 128))                               # lane dense
    L_pad = jnp.zeros((S_pad, C_pad), jnp.float32).at[:S, :C].set(L)  # OOB rows -> zero logits
    return L_pad


def metadata_forward(idx, logits_table):
    """Per-call forward: reshape/pad idx, launch the kernel.  Returns the padded
    (B_pad, C_pad) logits slab; the consumer reads [:B, :classes]."""
    B = idx.shape[0]
    S_pad, C_pad = logits_table.shape

    # Batch tiling: single block for small B; 256-row tiles sharded across
    # TensorCores ("parallel") for large B.
    if B <= 256:
        TB = B_pad = _round_up(B, 8)
    else:
        TB = 256
        B_pad = _round_up(B, TB)

    idx2d = jnp.zeros((B_pad, 1), jnp.int32).at[:B, 0].set(idx.astype(jnp.int32))

    cost = pl.CostEstimate(
        flops=2 * B_pad * S_pad * C_pad,
        transcendentals=0,
        bytes_accessed=4 * (B_pad + S_pad * C_pad + B_pad * C_pad),
    )

    out = pl.pallas_call(
        metadata_kernel,
        out_shape=jax.ShapeDtypeStruct((B_pad, C_pad), jnp.float32),
        grid=(B_pad // TB,),
        in_specs=[
            pl.BlockSpec((TB, 1), lambda i: (i, 0)),          # idx tile
            pl.BlockSpec((S_pad, C_pad), lambda i: (0, 0)),   # fused logits table (resident)
        ],
        out_specs=pl.BlockSpec((TB, C_pad), lambda i: (i, 0)),
        compiler_params=pltpu.CompilerParams(dimension_semantics=("parallel",)),
        cost_estimate=cost,
    )(idx2d, logits_table)

    return out


if __name__ == "__main__":
    sites, classes, batch = 20, 10, 8

    key = jax.random.PRNGKey(0)
    k_tab, k_w, k_b, k_idx = jax.random.split(key, 4)

    # Deterministic parameter init (shapes from module __init__)
    table = jax.random.normal(k_tab, (sites, EMB_DIM), dtype=jnp.float32)        # Embedding weight
    gamma = jnp.ones((EMB_DIM,), jnp.float32)                                    # BN weight
    beta = jnp.zeros((EMB_DIM,), jnp.float32)                                    # BN bias
    run_mean = jnp.zeros((EMB_DIM,), jnp.float32)                                # BN running_mean
    run_var = jnp.ones((EMB_DIM,), jnp.float32)                                  # BN running_var
    bound = 1.0 / (EMB_DIM ** 0.5)
    W = jax.random.uniform(k_w, (EMB_DIM, classes), jnp.float32, -bound, bound)  # Linear weight (in,out)
    b = jax.random.uniform(k_b, (classes,), jnp.float32, -bound, bound)          # Linear bias

    # Input: integer site ids, shape (B,)
    idx = jax.random.randint(k_idx, (batch,), 0, sites, dtype=jnp.int32)

    # --- init-time: fold everything once ---
    logits_table = jax.block_until_ready(
        metadata_prepare(table, gamma, beta, run_mean, run_var, W, b))

    # --- hot path: one tiny kernel launch ---
    out_padded = jax.block_until_ready(metadata_forward(idx, logits_table))

    # Consumer-side slice of the valid region (outside the hot path).
    out = out_padded[:batch, :classes]

    # Pure-JAX reference of the unfused module (eval mode)
    emb = jnp.take(table, idx, axis=0)
    ref = (emb - run_mean) / jnp.sqrt(run_var + BN_EPS) * gamma + beta
    ref = ref @ W + b

    assert out.shape == (batch, classes)
    assert jnp.allclose(out, ref, atol=1e-4, rtol=1e-4)

    print("KERNEL_OK")
</pallas_src>

<mosaic_0001>
module attributes {stable_mosaic.version = 11 : i64} {
  func.func @metadata_kernel(%arg0: i32, %arg1: memref<8x1xi32, #tpu.memory_space<vmem>>, %arg2: memref<24x128xf32, #tpu.memory_space<vmem>>, %arg3: memref<8x128xf32, #tpu.memory_space<vmem>>) attributes {dimension_semantics = [#tpu.dimension_semantics<parallel>], iteration_bounds = array<i64: 1>, scalar_prefetch = 0 : i64, scratch_operands = 0 : i64, tpu.core_type = #tpu.core_type<tc>, window_params = [{transform_indices = @transform_0, window_bounds = array<i64: 8, 1>}, {pipeline_mode = #tpu.pipeline_mode<synchronous>, transform_indices = @transform_1, window_bounds = array<i64: 24, 128>}, {transform_indices = @transform_2, window_bounds = array<i64: 8, 128>}]} {
    %0 = tpu.iota {dimensions = array<i32: 1>} : vector<8x24xi32>
    %c0 = arith.constant 0 : index
    %c0_0 = arith.constant 0 : index
    %1 = vector.load %arg1[%c0, %c0_0] : memref<8x1xi32, #tpu.memory_space<vmem>>, vector<8x1xi32>
    %2 = vector.broadcast %1 : vector<8x1xi32> to vector<8x24xi32>
    %3 = arith.cmpi eq, %2, %0 : vector<8x24xi32>
    %4 = arith.extui %3 : vector<8x24xi1> to vector<8x24xi32>
    %5 = arith.sitofp %4 : vector<8x24xi32> to vector<8x24xf32>
    %c0_1 = arith.constant 0 : index
    %c0_2 = arith.constant 0 : index
    %6 = vector.load %arg2[%c0_1, %c0_2] : memref<24x128xf32, #tpu.memory_space<vmem>>, vector<24x128xf32>
    %cst = arith.constant dense<0.000000e+00> : vector<8x128xf32>
    %7 = tpu.matmul %5, %6, %cst {dimension_numbers = #tpu.dot_dimension_numbers<[1], [0], [0], [1], [0, 0, 1, 1], [], []>} : vector<8x24xf32>, vector<24x128xf32>, vector<8x128xf32> -> vector<8x128xf32>
    %c0_3 = arith.constant 0 : index
    %c0_4 = arith.constant 0 : index
    %8 = vector.load %arg3[%c0_3, %c0_4] : memref<8x128xf32, #tpu.memory_space<vmem>>, vector<8x128xf32>
    tpu.vector_store %arg3[%c0_3, %c0_4], %7 {strides = array<i32>} : memref<8x128xf32, #tpu.memory_space<vmem>>, vector<8x128xf32>,
    return
  }
  func.func @transform_0(%arg0: i32) -> (i32, i32) {
    %c0_i32 = arith.constant 0 : i32
    %c0_i32_0 = arith.constant 0 : i32
    return %arg0, %c0_i32 : i32, i32
  }
  func.func @transform_1(%arg0: i32) -> (i32, i32) {
    %c0_i32 = arith.constant 0 : i32
    %c0_i32_0 = arith.constant 0 : i32
    %c0_i32_1 = arith.constant 0 : i32
    return %c0_i32, %c0_i32_0 : i32, i32
  }
  func.func @transform_2(%arg0: i32) -> (i32, i32) {
    %c0_i32 = arith.constant 0 : i32
    %c0_i32_0 = arith.constant 0 : i32
    return %arg0, %c0_i32 : i32, i32
  }
}

</mosaic_0001>

<llo_original>
// kernel: tpu_custom_call.1
$region0: #{tpu_custom_call.1}
  #allocation0 [shape = 'u32[]', space=smem, size = 0x4, offset = 0x4, fixed_abs, tag = 'smem constant byte address 0x4 - core index']
  #allocation1 [shape = 'u32[144,128]{1,0:T(1,128)}', space=vmem, size = 0x12000, scoped, tag = 'internal scratch']
  %s0 = inlined_call_operand.vmem [shape: s32[8,1], index: 0, kind: input, shape index: {}]
  %s1 = inlined_call_operand.hbm [shape: f32[24,128], index: 1, kind: input, shape index: {}]
  %s2 = inlined_call_operand.hbm [shape: f32[8,128], index: 2, kind: output, shape index: {}]
  %s3 = sld [smem:[#allocation0]]
  $region22: #{tpu_custom_call.1} parent=0
    _
  %s5 = ssub.s32 1, %s3
  %s6 = scalar_select 0, %s5, %s3
  $region1: #{tpu_custom_call.1} parent=0
    #allocation2 [shape = 'u8[12288]{0}', space=vmem, size = 0x3000, scoped, tag = 'input window, operand 1, single buffered']
    #allocation3 [shape = 's32[1]{0}', space=sflag, size = 0x4, scoped, tag = 'scoped memory for tpu_custom_call.1']
    #allocation4 [shape = 's32[1]{0}', space=sflag, size = 0x4, scoped, tag = 'scoped memory for tpu_custom_call.1']
    #allocation5 [shape = 'u8[4096]{0}', space=vmem, size = 0x1000, scoped, tag = 'output window, operand 0, single buffered']
    %7 = vsyncpa [#allocation3], 0
    %8 = vsyncpa [#allocation4], 0
    // Predicated region
    $region2: #{tpu_custom_call.1} parent=1 // pred_check
      _
    $region3: #{tpu_custom_call.1} parent=1 // pred_check_branch
      %10 = sbr.rel (0) target = $region5
    $region4: #{tpu_custom_call.1} parent=1 // pred_region
      _
    $region5: #{tpu_custom_call.1} parent=1 // pred_fallthru
      _
    // Predicated region
    $region6: #{tpu_custom_call.1} parent=1 // pred_check
      _
    $region7: #{tpu_custom_call.1} parent=1 // pred_check_branch
      %12 = sbr.rel (0) target = $region9
    $region8: #{tpu_custom_call.1} parent=1 // pred_region
      %s14 = ssub.s32 384, 384
      %15 = vsyncadd [#allocation3], %s14
      %s16 = sshll.u32 [#allocation2], 4
      %s17 = int_to_ptr.vmem [resolvable:$true] %s16
      %22 = dma.hbm_to_vmem [thread:$0]  %s1, 384, %s17, [#allocation3], 128, 128, 8
    $region9: #{tpu_custom_call.1} parent=1 // pred_fallthru
      _
    // Predicated region
    $region10: #{tpu_custom_call.1} parent=1 // pred_check
      _
    $region11: #{tpu_custom_call.1} parent=1 // pred_check_branch
      %24 = sbr.rel (0) target = $region13
    $region12: #{tpu_custom_call.1} parent=1 // pred_region
      %25 = dma.done [#allocation3], 384
    $region13: #{tpu_custom_call.1} parent=1 // pred_fallthru
      _
    %v26 = vlaneseq
    %v27 = vand.u32 %v26, 127
    %v28 = vld [vmem:[%s0] sm:$0xff]
    %29 = vset.pattern.permute.xlu0 0
    %30 = vperm.xlu0 %29, %v28
    %v31 = vpop.permute.xlu0 %30
    %vm32 = vcmp.eq.s32.totalorder %v31, %v27
    %v33 = vsel %vm32, 1, 0
    %v34 = vcvt.s32.f32 %v33
    %v35 = vld [vmem:[#allocation2] sm:$0xff]
    %v36 = vld [vmem:[#allocation2 + $0x8] sm:$0xff]
    %v37 = vld [vmem:[#allocation2 + $0x10] sm:$0xff]
    %vm38 = vcmask 195584
    %v40 = vsel %vm38, %v34, 0
    %42 = vmatprep.subr.mxu0 0.0
    %43 = vmatpush1.msra.mxu0 0.0
    %44 = vmatprep.subr.mxu0 0.0
    %45 = vmatpush1.msra.mxu0 0.0
    %46 = vmatprep.subr.mxu0 0.0
    %47 = vmatpush1.msra.mxu0 0.0
    %48 = vmatprep.subr.mxu0 0.0
    %49 = vmatpush1.msra.mxu0 0.0
    %50 = vmatprep.subr.mxu0 0.0
    %51 = vmatpush1.msra.mxu0 0.0
    %52 = vmatprep.subr.mxu0 0.0
    %53 = vmatpush1.msra.mxu0 0.0
    %54 = vmatprep.subr.mxu0 0.0
    %55 = vmatpush1.msra.mxu0 0.0
    %56 = vmatprep.subr.mxu0 0.0
    %57 = vmatpush1.msra.mxu0 0.0
    %58 = vmatprep.subr.mxu0 0.0
    %59 = vmatpush1.msra.mxu0 0.0
    %60 = vmatprep.subr.mxu0 0.0
    %61 = vmatpush1.msra.mxu0 0.0
    %62 = vmatprep.subr.mxu0 0.0
    %63 = vmatpush1.msra.mxu0 0.0
    %64 = vmatprep.subr.mxu0 0.0
    %65 = vmatpush1.msra.mxu0 0.0
    %66 = vmatprep.subr.mxu0 0.0
    %67 = vmatpush1.msra.mxu0 0.0
    %68 = vmatprep.subr.mxu0 0.0
    %69 = vmatpush1.msra.mxu0 %v37
    %70 = vmatprep.subr.mxu0 0.0
    %71 = vmatpush1.msra.mxu0 %v36
    %72 = vmatprep.subr.mxu0 0.0
    %73 = vmatpush1.msra.mxu0 %v35
    %74 = vmatprep.subr.mxu0 0.0
    %75 = vmatpush2.msra.mxu0 0.0
    %76 = vmatprep.subr.mxu0 0.0
    %77 = vmatpush2.msra.mxu0 0.0
    %78 = vmatprep.subr.mxu0 0.0
    %79 = vmatpush2.msra.mxu0 0.0
    %80 = vmatprep.subr.mxu0 0.0
    %81 = vmatpush2.msra.mxu0 0.0
    %82 = vmatprep.subr.mxu0 0.0
    %83 = vmatpush2.msra.mxu0 0.0
    %84 = vmatprep.subr.mxu0 0.0
    %85 = vmatpush2.msra.mxu0 0.0
    %86 = vmatprep.subr.mxu0 0.0
    %87 = vmatpush2.msra.mxu0 0.0
    %88 = vmatprep.subr.mxu0 0.0
    %89 = vmatpush2.msra.mxu0 0.0
    %90 = vmatprep.subr.mxu0 0.0
    %91 = vmatpush2.msra.mxu0 0.0
    %92 = vmatprep.subr.mxu0 0.0
    %93 = vmatpush2.msra.mxu0 0.0
    %94 = vmatprep.subr.mxu0 0.0
    %95 = vmatpush2.msra.mxu0 0.0
    %96 = vmatprep.subr.mxu0 0.0
    %97 = vmatpush2.msra.mxu0 0.0
    %98 = vmatprep.subr.mxu0 0.0
    %99 = vmatpush2.msra.mxu0 0.0
    %100 = vmatprep.subr.mxu0 0.0
    %101 = vmatpush2.msra.mxu0 0.0
    %102 = vmatprep.subr.mxu0 0.0
    %103 = vmatpush2.msra.mxu0 0.0
    %104 = vmatprep.subr.mxu0 0.0
    %105 = vmatpush2.msra.mxu0 0.0
    %106 = vmatprep.mubr.f32.mxu0 0.0
    %107 = vmatmul.mubr.f32.gmra.mxu0 %v40
    %v108 = vpop.f32.mrf.mxu0
    %v109 = vadd.f32 0.0, %v108
    %v110 = vpop.f32.mrf.mxu0
    %111 = vdwg.mxu0
    %112 = vst [vmem:[#allocation5] sm:$0xff] %v109
    // Predicated region
    $region14: #{tpu_custom_call.1} parent=1 // pred_check
      _
    $region15: #{tpu_custom_call.1} parent=1 // pred_check_branch
      %114 = sbr.rel (0) target = $region17
    $region16: #{tpu_custom_call.1} parent=1 // pred_region
      %s116 = ssub.s32 128, 128
      %117 = vsyncadd [#allocation4], %s116
      %s119 = sshll.u32 [#allocation5], 4
      %s120 = int_to_ptr.vmem [resolvable:$true] %s119
      %122 = dma.vmem_to_hbm [thread:$0]  %s120, 128, %s2, [#allocation4]
    $region17: #{tpu_custom_call.1} parent=1 // pred_fallthru
      _
    // Predicated region
    $region18: #{tpu_custom_call.1} parent=1 // pred_check
      _
    $region19: #{tpu_custom_call.1} parent=1 // pred_check_branch
      %124 = sbr.rel (0) target = $region21
    $region20: #{tpu_custom_call.1} parent=1 // pred_region
      %125 = dma.done [#allocation4], 128
    $region21: #{tpu_custom_call.1} parent=1 // pred_fallthru
      _
    %126 = vsyncpa [#allocation3], 1
    %127 = vsyncpa [#allocation4], 1

</llo_original>
